<compile_context>
chip_gen: v5e
topology: v5e:2x2
jax: 0.10.0
libtpu: 0.0.40
codegen_flags: <defaults>
</compile_context>

<pallas_src>
import math

import jax
import jax.numpy as jnp
from jax.experimental import pallas as pl
from jax.experimental.pallas import tpu as pltpu


def _round_up(x, m):
    return ((x + m - 1) // m) * m


def _vmem_capacity_bytes():
    """Physical VMEM per TensorCore, with conservative fallbacks."""
    try:
        return int(pltpu.get_tpu_info().vmem_capacity_bytes)
    except Exception:
        pass
    try:
        kind = jax.devices()[0].device_kind.lower()
        if "v5" in kind or "v6" in kind:
            return 128 * 2**20
    except Exception:
        pass
    return 64 * 2**20          # safe on every generation (v7x floor)


def make_conv1d(N, C_in, C_out, L, K, stride=1, padding=None, dilation=1,
                compute_dtype=jnp.bfloat16, out_dtype=None,
                force_chunked=False):
    """Builds a Pallas conv1d matching torch.nn.Conv1d (NCL) forward semantics.

    compute_dtype: MXU input dtype (bf16 halves DMA bytes; pass jnp.float32
      for accuracy-sensitive callers).
    out_dtype: dtype stored by the kernel; None -> same dtype as x.
    force_chunked: force the non-resident (chunked) input path (testing).
    """
    if padding is None:
        assert K % 2 == 1, "padding=None requires an odd kernel_size"
        padding = int(dilation * (K - 1) / 2)
    L_pad = L + 2 * padding
    L_out = (L_pad - dilation * (K - 1) - 1) // stride + 1
    assert L_out >= 1

    compute_dtype = jnp.dtype(compute_dtype)
    cbytes = compute_dtype.itemsize
    sub = {2: 16, 4: 8}.get(cbytes, 8)      # sublane-packing rows for dtype
    C_in_p = _round_up(C_in, sub)           # sublane-aligned channel rows
    S_rows = stride * C_in_p                # rows of the phase-decimated input

    # ---- lane-dense output tiling (multiples of 128) ----
    L_out_128 = _round_up(L_out, 128)
    L_tile = 128
    for cand in (1024, 512, 256, 128):
        if cand <= L_out_128 and (cand < 1024 or L_out_128 >= 2048):
            L_tile = cand
            break
    # v7x megacore: keep >= 2 grid steps when possible so both TCs get work.
    while N * (_round_up(L_out, L_tile) // L_tile) < 2 and L_tile > 128:
        L_tile //= 2
    L_out_padded = _round_up(L_out, L_tile)
    num_l_tiles = L_out_padded // L_tile

    # ---- stride phase decomposition (done in the wrapper) ----
    # out[n,o,l] = b[o] + sum_{c,k} w[o,c,k] * x_pad[n,c, l*stride + k*dil]
    # With k*dil = q_k*stride + r_k the tap-k read is a CONTIGUOUS slice
    #   x_ph[n, r_k*C_in_p + c, l + q_k],
    # where x_ph[n, s*C_in_p + c, m] = x_pad[n, c, m*stride + s].
    q_max = ((K - 1) * dilation) // stride
    L_phase = _round_up(max(L_out_padded + q_max, -(-L_pad // stride)), 128)
    L_total = L_phase * stride

    # ---- residency decision + generation-aware VMEM budget ----
    vmem_budget = int(_vmem_capacity_bytes() * 0.87)   # ~56 MiB v7x, ~111 MiB v5e/v6e
    halo = _round_up(q_max, 128) if q_max else 0
    chunk_w = L_tile + halo                            # fallback chunk width

    def _need(in_cols):
        return (2 * S_rows * in_cols * cbytes          # double-buffered input
                + 2 * C_out * L_tile * 4               # double-buffered output
                + 2 * K * C_out * C_in_p * cbytes      # weights
                + 2 * C_out * 128 * 4                  # bias
                + C_out * L_tile * 4                   # f32 accumulator slack
                + (2 << 20))                           # compiler headroom

    resident = (not force_chunked) and (_need(L_phase) <= vmem_budget)
    need = _need(L_phase if resident else chunk_w)
    vmem_limit = int(min(vmem_budget, max(need, 32 * 2**20)))

    def kernel(x_ref, w_ref, b_ref, o_ref):
        # x_ref: (1, S_rows, L_phase|chunk_w)  compute_dtype
        # w_ref: (K, C_out, C_in_p)            compute_dtype (zero-padded C_in)
        # b_ref: (C_out, 1)                    f32
        # o_ref: (1, C_out, L_tile)            out dtype
        col0 = pl.multiple_of(pl.program_id(1) * L_tile, 128) if resident else 0
        acc = None
        for k in range(K):                     # K is small and static
            q_k, r_k = divmod(k * dilation, stride)
            # Sublane-aligned row start (C_in_p is a sublane multiple); the
            # lane offset q_k is accepted (2 aligned vloads + rotate per vreg)
            # since the vld slot is not the bottleneck for these shapes.
            tap = x_ref[0, pl.ds(r_k * C_in_p, C_in_p),
                        pl.ds(col0 + q_k, L_tile)]
            part = jnp.dot(w_ref[k], tap, preferred_element_type=jnp.float32)
            acc = part if acc is None else acc + part
        o_ref[0] = (acc + b_ref[...]).astype(o_ref.dtype)

    if resident:
        # Block index constant along the tile axis -> the padded input for
        # batch row n is DMA'd once and stays resident in VMEM.
        x_spec = pl.BlockSpec((1, S_rows, L_phase), lambda n, j: (n, 0, 0))
    else:
        # Fallback: per-(row, tile) overlapping chunks (tile + halo) built by
        # the wrapper; each chunk fits the VMEM budget.
        x_spec = pl.BlockSpec((1, S_rows, chunk_w),
                              lambda n, j: (n * num_l_tiles + j, 0, 0))
    w_spec = pl.BlockSpec((K, C_out, C_in_p), lambda n, j: (0, 0, 0))
    b_spec = pl.BlockSpec((C_out, 1), lambda n, j: (0, 0))
    o_spec = pl.BlockSpec((1, C_out, L_tile), lambda n, j: (n, 0, j))

    def _conv(x, w, b):
        assert x.shape == (N, C_in, L)
        odt = jnp.dtype(out_dtype) if out_dtype is not None else jnp.dtype(x.dtype)

        # ---- wrapper glue: one fused pad (channels + length), optional
        #      stride phase decimation, dtype cast (fused under jit) ----
        xc = x.astype(compute_dtype)
        x_tot = jnp.pad(xc, ((0, 0),
                             (0, C_in_p - C_in),
                             (padding, L_total - L - padding)))
        if stride == 1:
            x_ph = x_tot                                   # (N, C_in_p, L_phase)
        else:
            x_ph = (x_tot.reshape(N, C_in_p, L_phase, stride)
                         .transpose(0, 3, 1, 2)
                         .reshape(N, S_rows, L_phase))
        if resident:
            x_in = x_ph
        else:
            x_in = jnp.stack(
                [x_ph[:, :, j * L_tile:j * L_tile + chunk_w]
                 for j in range(num_l_tiles)], axis=1
            ).reshape(N * num_l_tiles, S_rows, chunk_w)

        w2 = jnp.pad(jnp.transpose(w, (2, 0, 1)),          # (K, C_out, C_in)
                     ((0, 0), (0, 0), (0, C_in_p - C_in))).astype(compute_dtype)
        b2 = b.reshape(C_out, 1).astype(jnp.float32)

        cost = pl.CostEstimate(
            flops=2 * N * C_out * C_in * K * L_out,
            transcendentals=0,
            bytes_accessed=(x_in.size * cbytes + w2.size * cbytes
                            + N * C_out * L_out_padded * odt.itemsize))

        out = pl.pallas_call(
            kernel,
            out_shape=jax.ShapeDtypeStruct((N, C_out, L_out_padded), odt),
            grid=(N, num_l_tiles),
            in_specs=[x_spec, w_spec, b_spec],
            out_specs=o_spec,
            compiler_params=pltpu.CompilerParams(
                dimension_semantics=("parallel", "parallel"),
                vmem_limit_bytes=vmem_limit),
            cost_estimate=cost,
        )(x_in, w2, b2)
        return out[:, :, :L_out]

    return jax.jit(_conv), padding, L_out


def init_params(key, C_in, C_out, K, w_init_gain="linear"):
    """Replicates the module's init: xavier_uniform_ on the weight
    (gain = calculate_gain('linear') == 1.0) and PyTorch's default Conv1d bias
    init U(-1/sqrt(fan_in), 1/sqrt(fan_in))."""
    kw, kb = jax.random.split(key)
    gain = 1.0
    fan_in = C_in * K
    fan_out = C_out * K
    w_bound = gain * math.sqrt(6.0 / (fan_in + fan_out))
    w = jax.random.uniform(kw, (C_out, C_in, K), jnp.float32,
                           minval=-w_bound, maxval=w_bound)
    b_bound = 1.0 / math.sqrt(fan_in)
    b = jax.random.uniform(kb, (C_out,), jnp.float32,
                           minval=-b_bound, maxval=b_bound)
    return w, b


if __name__ == "__main__":
    key = jax.random.PRNGKey(0)

    def reference(x, w, b, stride, padding, dilation):
        return jax.lax.conv_general_dilated(
            x, w, window_strides=(stride,), padding=[(padding, padding)],
            rhs_dilation=(dilation,),
            dimension_numbers=("NCH", "OIH", "NCH"),
        ) + b[None, :, None]

    # (N, C_in, C_out, L, K, stride, dilation, force_chunked)
    configs = [
        (2, 4, 8, 16, 1, 1, 1, False),   # module default kernel_size=1
        (2, 4, 8, 16, 3, 1, 1, False),   # "same" padding
        (2, 4, 8, 16, 3, 2, 1, False),   # strided
        (2, 4, 8, 16, 3, 1, 2, False),   # dilated
        (2, 4, 8, 16, 3, 1, 1, True),    # exercises the chunked fallback path
    ]
    for N, C_in, C_out, L, K, stride, dilation, chunked in configs:
        key, kx, kp = jax.random.split(key, 3)
        x = jax.random.normal(kx, (N, C_in, L), jnp.float32)
        w, b = init_params(kp, C_in, C_out, K)

        conv1d, padding, L_out = make_conv1d(
            N, C_in, C_out, L, K, stride=stride, padding=None,
            dilation=dilation, compute_dtype=jnp.bfloat16,
            force_chunked=chunked)

        out = jax.block_until_ready(conv1d(x, w, b))

        # bf16 is the MXU-native input dtype; compare against an f32 reference
        # evaluated on bf16-rounded inputs (accumulation is f32 on both sides).
        xq = x.astype(jnp.bfloat16).astype(jnp.float32)
        wq = w.astype(jnp.bfloat16).astype(jnp.float32)
        ref = reference(xq, wq, b, stride, padding, dilation)

        assert out.shape == (N, C_out, L_out), (out.shape, (N, C_out, L_out))
        assert out.dtype == x.dtype, out.dtype
        assert jnp.allclose(out, ref, atol=1e-4, rtol=1e-4), (
            K, stride, dilation, chunked, float(jnp.max(jnp.abs(out - ref))))

    print("KERNEL_OK")
</pallas_src>

<mosaic_0001>
module attributes {stable_mosaic.version = 11 : i64} {
  func.func @kernel(%arg0: i32, %arg1: i32, %arg2: memref<1x16x128xbf16, #tpu.memory_space<vmem>>, %arg3: memref<1x8x16xbf16, #tpu.memory_space<vmem>>, %arg4: memref<8x1xf32, #tpu.memory_space<vmem>>, %arg5: memref<1x8x128xf32, #tpu.memory_space<vmem>>) attributes {dimension_semantics = [#tpu.dimension_semantics<parallel>, #tpu.dimension_semantics<parallel>], iteration_bounds = array<i64: 2, 1>, scalar_prefetch = 0 : i64, scratch_operands = 0 : i64, tpu.core_type = #tpu.core_type<tc>, window_params = [{transform_indices = @transform_0, window_bounds = array<i64: 1, 16, 128>}, {pipeline_mode = #tpu.pipeline_mode<synchronous>, transform_indices = @transform_1, window_bounds = array<i64: 1, 8, 16>}, {pipeline_mode = #tpu.pipeline_mode<synchronous>, transform_indices = @transform_2, window_bounds = array<i64: 8, 1>}, {transform_indices = @transform_3, window_bounds = array<i64: 1, 8, 128>}]} {
    %c128_i32 = arith.constant 128 : i32
    %0 = arith.muli %arg1, %c128_i32 : i32
    %1 = tpu.assume_multiple %0, 128 : i32
    %c0_i32 = arith.constant 0 : i32
    %2 = arith.addi %1, %c0_i32 : i32
    %c0 = arith.constant 0 : index
    %c0_0 = arith.constant 0 : index
    %3 = arith.index_cast %2 : i32 to index
    %4 = vector.load %arg2[%c0, %c0_0, %3] : memref<1x16x128xbf16, #tpu.memory_space<vmem>>, vector<1x16x128xbf16>
    %5 = vector.shape_cast %4 : vector<1x16x128xbf16> to vector<16x128xbf16>
    %c0_1 = arith.constant 0 : index
    %c0_2 = arith.constant 0 : index
    %c0_3 = arith.constant 0 : index
    %6 = vector.load %arg3[%c0_1, %c0_2, %c0_3] : memref<1x8x16xbf16, #tpu.memory_space<vmem>>, vector<1x8x16xbf16>
    %7 = vector.shape_cast %6 : vector<1x8x16xbf16> to vector<8x16xbf16>
    %cst = arith.constant dense<0.000000e+00> : vector<8x128xf32>
    %8 = tpu.matmul %7, %5, %cst {dimension_numbers = #tpu.dot_dimension_numbers<[1], [0], [0], [1], [0, 0, 1, 1], [], []>} : vector<8x16xbf16>, vector<16x128xbf16>, vector<8x128xf32> -> vector<8x128xf32>
    %c0_4 = arith.constant 0 : index
    %c0_5 = arith.constant 0 : index
    %9 = vector.load %arg4[%c0_4, %c0_5] : memref<8x1xf32, #tpu.memory_space<vmem>>, vector<8x1xf32>
    %10 = vector.broadcast %9 : vector<8x1xf32> to vector<8x128xf32>
    %11 = arith.addf %8, %10 : vector<8x128xf32>
    %c0_6 = arith.constant 0 : index
    %c0_7 = arith.constant 0 : index
    %c0_8 = arith.constant 0 : index
    %12 = vector.load %arg5[%c0_6, %c0_7, %c0_8] : memref<1x8x128xf32, #tpu.memory_space<vmem>>, vector<1x8x128xf32>
    %13 = vector.shape_cast %12 : vector<1x8x128xf32> to vector<8x128xf32>
    %14 = vector.shape_cast %11 : vector<8x128xf32> to vector<1x8x128xf32>
    tpu.vector_store %arg5[%c0_6, %c0_7, %c0_8], %14 {strides = array<i32>} : memref<1x8x128xf32, #tpu.memory_space<vmem>>, vector<1x8x128xf32>,
    return
  }
  func.func @transform_0(%arg0: i32, %arg1: i32) -> (i32, i32, i32) {
    %c0_i32 = arith.constant 0 : i32
    %c0_i32_0 = arith.constant 0 : i32
    %c0_i32_1 = arith.constant 0 : i32
    return %arg0, %c0_i32, %c0_i32_0 : i32, i32, i32
  }
  func.func @transform_1(%arg0: i32, %arg1: i32) -> (i32, i32, i32) {
    %c0_i32 = arith.constant 0 : i32
    %c0_i32_0 = arith.constant 0 : i32
    %c0_i32_1 = arith.constant 0 : i32
    %c0_i32_2 = arith.constant 0 : i32
    return %c0_i32, %c0_i32_0, %c0_i32_1 : i32, i32, i32
  }
  func.func @transform_2(%arg0: i32, %arg1: i32) -> (i32, i32) {
    %c0_i32 = arith.constant 0 : i32
    %c0_i32_0 = arith.constant 0 : i32
    %c0_i32_1 = arith.constant 0 : i32
    return %c0_i32, %c0_i32_0 : i32, i32
  }
  func.func @transform_3(%arg0: i32, %arg1: i32) -> (i32, i32, i32) {
    %c0_i32 = arith.constant 0 : i32
    %c0_i32_0 = arith.constant 0 : i32
    return %arg0, %c0_i32, %arg1 : i32, i32, i32
  }
}

</mosaic_0001>

<llo_original>
// kernel: _conv.1
$region0: #{_conv.1}
  #allocation0 [shape = 'u32[]', space=smem, size = 0x4, offset = 0x4, fixed_abs, tag = 'smem constant byte address 0x4 - core index']
  #allocation1 [shape = 'u32[72,128]{1,0:T(1,128)}', space=vmem, size = 0x9000, scoped, tag = 'internal scratch']
  %s0 = inlined_call_operand.vmem [shape: bf16[2,16,128], index: 0, kind: input, shape index: {}]
  %s1 = inlined_call_operand.vmem [shape: bf16[1,8,16], index: 1, kind: input, shape index: {}]
  %s2 = inlined_call_operand.vmem [shape: f32[8,1], index: 2, kind: input, shape index: {}]
  %s3 = inlined_call_operand.hbm [shape: f32[2,8,128], index: 3, kind: output, shape index: {}]
  %s4 = sld [smem:[#allocation0]]
  $region45: #{_conv.1} parent=0
    _
  %s6 = ssub.s32 1, %s4
  %s7 = scalar_select 0, %s6, %s4
  $region1: #{_conv.1} parent=0
    #allocation2 [shape = 'u8[8192]{0}', space=vmem, size = 0x2000, scoped, tag = 'output window, operand 0']
    #allocation3 [shape = 's32[2]{0}', space=sflag, size = 0x8, scoped, tag = 'scoped memory for _conv.1']
    %8 = vsyncpa [#allocation3], 0
    %s9 = scalar_lea.sflag [#allocation3], 1
    %10 = vsyncpa %s9, 0
    loop: start=0, step=1, limit=4
    $region2: #{_conv.1} parent=1 // loop_pre_header
      _
    $region3: #{_conv.1} parent=1 // loop_header
      %s12 = sphi 0, %s16
      %p13 = scmp.ge.s32.totalorder %s12, 4
      %s19 = sphi 0, %s31
      %s20 = sphi 0, %s27
      %s21 = sphi 0, %s19
      %s22 = sphi 0, %s20
      %s23 = sphi 0, %s21
      %s24 = sphi 0, %s22
      %s34 = sphi 0, %s36
      %s37 = sphi 0, %s34
      %s38 = sphi 0, %s37
      %s54 = sphi 0, %s38
      %s58 = sphi 0, %s58
      %s60 = sphi 0, %s58
      %s61 = sphi 0, %s60
      %s75 = sphi 0, %s61
      %s79 = sphi 0, %s79
      %s81 = sphi 0, %s79
      %s82 = sphi 0, %s81
      %s96 = sphi 0, %s82
      %s104 = sphi 0, %s106
      %s107 = sphi 0, %s104
      %s108 = sphi 0, %s107
      %s124 = sphi 0, %s108
    $region4: #{_conv.1} parent=1 // loop_header_branch
      %15 = sbr.rel (%p13) target = $region8
    $region5: #{_conv.1} parent=1 // loop_body
      %s17 = ssub.s32 %s12, 1
      %s18 = ssub.s32 %s12, 2
      %s25 = sadd.s32 1, %s20
      %p26 = scmp.ge.s32.totalorder %s25, 1
      %s27 = scalar_select %p26, 0, %s25
      %s28 = sadd.s32 1, %s19
      %s29 = scalar_select %p26, %s28, %s19
      %p30 = scmp.ge.s32.totalorder %s29, 2
      %s31 = scalar_select %p30, 0, %s29
      %s32 = ssub.s32 %s19, %s31
      %p33 = scmp.eq.s32.totalorder %s32, 0
      %s35 = sadd.s32 %s34, 1
      %s36 = scalar_select %p33, %s34, %s35
      %p39 = pneg %p33
      %p40 = scmp.eq.s32.totalorder %s12, 1
      %p41 = por %p39, %p40
      %p42 = scmp.ne.s32.totalorder %s34, %s37
      %p43 = scmp.eq.s32.totalorder %s12, 0
      %p44 = por %p42, %p43
      %p45 = scmp.ne.s32.totalorder %s34, %s37
      %p46 = scmp.eq.s32.totalorder %s17, 1
      %p47 = por %p45, %p46
      %p48 = scmp.ne.s32.totalorder %s37, %s38
      %p49 = scmp.eq.s32.totalorder %s17, 0
      %p50 = por %p48, %p49
      %p51 = scmp.ne.s32.totalorder %s37, %s38
      %p52 = scmp.eq.s32.totalorder %s18, 1
      %p53 = por %p51, %p52
      %p55 = scmp.ne.s32.totalorder %s38, %s54
      %p56 = scmp.eq.s32.totalorder %s18, 0
      %p57 = por %p55, %p56
      %s59 = sadd.s32 %s58, 1
      %p62 = scmp.eq.s32.totalorder %s12, 1
      %p63 = scmp.ne.s32.totalorder %s58, %s60
      %p64 = scmp.eq.s32.totalorder %s12, 0
      %p65 = por %p63, %p64
      %p66 = scmp.ne.s32.totalorder %s58, %s60
      %p67 = scmp.eq.s32.totalorder %s17, 1
      %p68 = por %p66, %p67
      %p69 = scmp.ne.s32.totalorder %s60, %s61
      %p70 = scmp.eq.s32.totalorder %s17, 0
      %p71 = por %p69, %p70
      %p72 = scmp.ne.s32.totalorder %s60, %s61
      %p73 = scmp.eq.s32.totalorder %s18, 1
      %p74 = por %p72, %p73
      %p76 = scmp.ne.s32.totalorder %s61, %s75
      %p77 = scmp.eq.s32.totalorder %s18, 0
      %p78 = por %p76, %p77
      %s80 = sadd.s32 %s79, 1
      %p83 = scmp.eq.s32.totalorder %s12, 1
      %p84 = scmp.ne.s32.totalorder %s79, %s81
      %p85 = scmp.eq.s32.totalorder %s12, 0
      %p86 = por %p84, %p85
      %p87 = scmp.ne.s32.totalorder %s79, %s81
      %p88 = scmp.eq.s32.totalorder %s17, 1
      %p89 = por %p87, %p88
      %p90 = scmp.ne.s32.totalorder %s81, %s82
      %p91 = scmp.eq.s32.totalorder %s17, 0
      %p92 = por %p90, %p91
      %p93 = scmp.ne.s32.totalorder %s81, %s82
      %p94 = scmp.eq.s32.totalorder %s18, 1
      %p95 = por %p93, %p94
      %p97 = scmp.ne.s32.totalorder %s82, %s96
      %p98 = scmp.eq.s32.totalorder %s18, 0
      %p99 = por %p97, %p98
      %s100 = ssub.s32 %s19, %s31
      %s101 = ssub.s32 %s20, %s27
      %s102 = sor.u32 %s100, %s101
      %p103 = scmp.eq.s32.totalorder %s102, 0
      %s105 = sadd.s32 %s104, 1
      %s106 = scalar_select %p103, %s104, %s105
      %p109 = pneg %p103
      %p110 = scmp.eq.s32.totalorder %s12, 1
      %p111 = por %p109, %p110
      %p112 = scmp.ne.s32.totalorder %s104, %s107
      %p113 = scmp.eq.s32.totalorder %s12, 0
      %p114 = por %p112, %p113
      %p115 = scmp.ne.s32.totalorder %s104, %s107
      %p116 = scmp.eq.s32.totalorder %s17, 1
      %p117 = por %p115, %p116
      %p118 = scmp.ne.s32.totalorder %s107, %s108
      %p119 = scmp.eq.s32.totalorder %s17, 0
      %p120 = por %p118, %p119
      %p121 = scmp.ne.s32.totalorder %s107, %s108
      %p122 = scmp.eq.s32.totalorder %s18, 1
      %p123 = por %p121, %p122
      %p125 = scmp.ne.s32.totalorder %s108, %s124
      %p126 = scmp.eq.s32.totalorder %s18, 0
      %p127 = por %p125, %p126
      %p128 = scmp.le.s32.totalorder 1, %s12
      %p129 = scmp.lt.s32.totalorder %s12, 3
      %p130 = pnand %p128, %p129
      %p131 = pneg %p130
      // Predicated region
      $region9: #{_conv.1} parent=5 // pred_check
        _
      $region10: #{_conv.1} parent=5 // pred_check_branch
        %133 = sbr.rel (%p130) target = $region12
      $region11: #{_conv.1} parent=5 // pred_region
        %s134 = ssub.s32 %s12, 1
        // Predicated region
        $region13: #{_conv.1} parent=11 // pred_check
          %p135 = pneg %p71
        $region14: #{_conv.1} parent=11 // pred_check_branch
          %137 = sbr.rel (%p135) target = $region16
        $region15: #{_conv.1} parent=11 // pred_region
          _
        $region16: #{_conv.1} parent=11 // pred_fallthru
          _
        // Predicated region
        $region17: #{_conv.1} parent=11 // pred_check
          %p138 = pneg %p92
        $region18: #{_conv.1} parent=11 // pred_check_branch
          %140 = sbr.rel (%p138) target = $region20
        $region19: #{_conv.1} parent=11 // pred_region
          _
        $region20: #{_conv.1} parent=11 // pred_fallthru
          _
      $region12: #{_conv.1} parent=5 // pred_fallthru
        _
      %p141 = scmp.lt.s32.totalorder %s12, 2
      // Predicated region
      $region21: #{_conv.1} parent=5 // pred_check
        %p142 = pneg %p141
      $region22: #{_conv.1} parent=5 // pred_check_branch
        %144 = sbr.rel (%p142) target = $region24
      $region23: #{_conv.1} parent=5 // pred_region
        // Predicated region
        $region25: #{_conv.1} parent=23 // pred_check
          %p145 = pneg %p44
        $region26: #{_conv.1} parent=23 // pred_check_branch
          %147 = sbr.rel (%p145) target = $region28
        $region27: #{_conv.1} parent=23 // pred_region
          %p148 = scmp.lt.s32.totalorder %s19, 1
          %s149 = scalar_select %p148, %s19, 1
          %s150 = smul.addr %s149, 2
          %s151 = smul.addr %s150, 4
          %s152 = scalar_lea.vmem %s0, %s151
        $region28: #{_conv.1} parent=23 // pred_fallthru
          _
      $region24: #{_conv.1} parent=5 // pred_fallthru
        _
      %p153 = scmp.le.s32.totalorder 1, %s12
      %p154 = scmp.lt.s32.totalorder %s12, 3
      %p155 = pnand %p153, %p154
      %p156 = pneg %p155
      // Predicated region
      $region29: #{_conv.1} parent=5 // pred_check
        _
      $region30: #{_conv.1} parent=5 // pred_check_branch
        %158 = sbr.rel (%p155) target = $region32
      $region31: #{_conv.1} parent=5 // pred_region
        %s159 = ssub.s32 %s12, 1
        %p160 = scmp.lt.s32.totalorder %s21, 1
        %s161 = scalar_select %p160, %s21, 1
        %s162 = smul.addr %s161, 2
        %s163 = smul.addr %s162, 4
        %s164 = scalar_lea.vmem %s0, %s163
        %p165 = pneg %p50
        %p166 = pneg %p47
        %p167 = pneg %p71
        %p168 = pneg %p68
        %p169 = pneg %p92
        %p170 = pneg %p89
        %p171 = pneg %p120
        %p172 = pneg %p117
        %s173 = sand.u32 %s107, 1
        %s174 = scalar_lea.sflag [#allocation3], %s173
        %s175 = sand.u32 %s107, 1
        %s176 = smul.addr %s175, 8
        %s177 = scalar_lea.vmem [#allocation2], %s176
        %p178 = scmp.lt.s32.totalorder %s21, 1
        %s179 = scalar_select %p178, %s21, 1
        %s180 = smul.addr %s179, 2
        %s181 = smul.addr %s180, 4
        %s182 = scalar_lea.vmem %s0, %s181
        %s184 = smul.u32 %s22, 128
        %s185 = sshra.s32 %s184, 7
        %s186 = sand.u32 %s184, 127
        %s187 = smul.addr %s185, 4
        %s188 = scalar_lea.vmem %s182, %s187
        %v189 = vld [vmem:[%s188] sm:$0xf]
        %v190 = vld [vmem:[%s188 + $0x4] sm:$0xf]
        %v191 = vld [vmem:[%s1] sm:$0xf]
        %v192 = vld [vmem:[%s2] sm:$0xff]
        %194 = vset.pattern.permute.xlu0 0
        %195 = vperm.xlu0 %194, %v192
        %v196 = vpop.permute.xlu0 %195
        %v200 = vunpack.c.l.b16 %v189
        %v201 = vunpack.c.l.b16 %v190
        %v202 = vpack.c.b16 %v201, %v200
        %vm204 = vcmask 130048
        %v206 = vsel %vm204, %v191, 0
        %208 = vmatpush.bf16.msra.mxu0 0
        %209 = vmatpush.bf16.msra.mxu0 0
        %210 = vmatpush.bf16.msra.mxu0 0
        %211 = vmatpush.bf16.msra.mxu0 0
        %212 = vmatpush.bf16.msra.mxu0 0
        %213 = vmatpush.bf16.msra.mxu0 0
        %214 = vmatpush.bf16.msra.mxu0 0
        %215 = vmatpush.bf16.msra.mxu0 %v202
        %216 = vmatmul.bf16.gmra.mxu0 %v206
        %v217 = vpop.f32.mrf.mxu0
        %v218 = vadd.f32 %v196, %v217
        %v219 = vpop.f32.mrf.mxu0
        %220 = vdwg.mxu0
        %221 = vst [vmem:[%s177] sm:$0xff] %v218
        %s222 = sand.u32 %s107, 1
        %s223 = scalar_lea.sflag [#allocation3], %s222
        %s224 = sand.u32 %s107, 1
        %s225 = smul.addr %s224, 8
        %s226 = scalar_lea.vmem [#allocation2], %s225
        // Predicated region
        $region33: #{_conv.1} parent=31 // pred_check
          %p227 = pneg %p117
        $region34: #{_conv.1} parent=31 // pred_check_branch
          %229 = sbr.rel (%p227) target = $region36
        $region35: #{_conv.1} parent=31 // pred_region
          %231 = vsyncadd %s223, 0
          %s232 = sadd.s32 %s22, %s21
          %s233 = smul.addr %s232, 8
          %s234 = scalar_lea.hbm %s3, %s233
          %s236 = sshll.u32 %s226, 4
          %s237 = int_to_ptr.vmem [resolvable:$true] %s236
          %s238 = sshll.u32 %s234, 4
          %s239 = int_to_ptr.hbm [resolvable:$true] %s238
          %241 = dma.vmem_to_hbm [thread:$0]  %s237, 128, %s239, %s223
        $region36: #{_conv.1} parent=31 // pred_fallthru
          _
      $region32: #{_conv.1} parent=5 // pred_fallthru
        _
      %p242 = scmp.le.s32.totalorder 2, %s12
      // Predicated region
      $region37: #{_conv.1} parent=5 // pred_check
        %p243 = pneg %p242
      $region38: #{_conv.1} parent=5 // pred_check_branch
        %245 = sbr.rel (%p243) target = $region40
      $region39: #{_conv.1} parent=5 // pred_region
        %s246 = ssub.s32 %s12, 2
        // Predicated region
        $region41: #{_conv.1} parent=39 // pred_check
          %p247 = pneg %p123
        $region42: #{_conv.1} parent=39 // pred_check_branch
          %249 = sbr.rel (%p247) target = $region44
        $region43: #{_conv.1} parent=39 // pred_region
          %s250 = sand.u32 %s108, 1
          %s251 = scalar_lea.sflag [#allocation3], %s250
          %s252 = sand.u32 %s108, 1
          %s253 = smul.addr %s252, 8
          %s254 = scalar_lea.vmem [#allocation2], %s253
          %256 = dma.done %s251, 128
        $region44: #{_conv.1} parent=39 // pred_fallthru
          _
      $region40: #{_conv.1} parent=5 // pred_fallthru
        _
    $region6: #{_conv.1} parent=1 // loop_footer
      %s16 = sadd.s32 1, %s12
    $region7: #{_conv.1} parent=1 // loop_footer_branch
      %11 = sbr.rel target = $region3
    $region8: #{_conv.1} parent=1 // loop_exit
      _
    %257 = vsyncpa [#allocation3], 1
    %s258 = scalar_lea.sflag [#allocation3], 1
    %259 = vsyncpa %s258, 1

</llo_original>
